<compile_context>
chip_gen: v5e
topology: v5e:2x2
jax: 0.10.0
libtpu: 0.0.40
codegen_flags: <defaults>
</compile_context>

<pallas_src>
import functools

import jax
import jax.numpy as jnp
from jax.experimental import pallas as pl
from jax.experimental.pallas import tpu as pltpu


LANE = 128          # head output channels padded to this (lane-dense, unmasked stores)
B_TILE_TARGET = 8   # images per grid step (capped so the grid keeps >= 2 steps)


def _round_up(x, m):
    return (x + m - 1) // m * m


# ----------------------------------------------------------------------------
# Fused kernel: one grid step == B_TILE images, everything resident in VMEM.
# ----------------------------------------------------------------------------
def _fused_ocr_kernel(x_ref, convw_ref, neckw_ref, headw_ref, bias_ref, o_ref,
                      *, H, W, bt):
    """
    x_ref     : (bt, H*W, Kp)  bf16  im2col patches; channel 9*C_in is a constant-1
                                     "bias lane" (BN shift rides inside conv_w).
    convw_ref : (Kp, C_bb)     bf16  conv weight, tap-major, BN scale folded in;
                                     row 9*C_in holds the folded conv-bias/BN shift.
    neckw_ref : (C_bb, C_neck) bf16
    headw_ref : (C_neck, 128)  bf16  zero-padded past num_classes.
    bias_ref  : (2, 128)       f32   row 0 = neck bias (first C_neck lanes),
                                     row 1 = head bias.
    o_ref     : (bt, W, 128)   f32   lane-dense logits slab.
    """
    HW = H * W
    kp = convw_ref.shape[0]
    c_bb = convw_ref.shape[1]
    c_neck = neckw_ref.shape[1]
    n_out = headw_ref.shape[1]

    # ---- Backbone: 3x3 conv (+ folded BN) as ONE K=Kp matmul, M = bt*H*W.
    xim = x_ref[...].reshape(bt * HW, kp)                                  # bf16
    bb = jnp.dot(xim, convw_ref[...], preferred_element_type=jnp.float32)  # (bt*HW, C_bb)
    bb = jnp.maximum(bb, 0.0)                                              # ReLU, f32

    # ---- Backbone tail + Im2Seq: adaptive avg-pool over H (H -> 1), squeeze.
    seq = bb.reshape(bt, H, W, c_bb).sum(axis=1) * (1.0 / H)               # (bt, W, C_bb)
    seq = seq.reshape(bt * W, c_bb)

    biases = bias_ref[...]                                                 # (2, 128) f32

    # ---- Neck: Linear + ReLU (single matmul, M = bt*W).
    nk = jnp.dot(seq.astype(jnp.bfloat16), neckw_ref[...],
                 preferred_element_type=jnp.float32)
    nk = jnp.maximum(nk + biases[0:1, :c_neck], 0.0)                       # (bt*W, C_neck)

    # ---- Head: CTC Linear (lane-padded to 128; wrapper strips the padding).
    hd = jnp.dot(nk.astype(jnp.bfloat16), headw_ref[...],
                 preferred_element_type=jnp.float32) + biases[1:2, :]
    o_ref[...] = hd.reshape(bt, W, n_out).astype(o_ref.dtype)


def fused_ocr_forward(patches, conv_w, neck_w, head_w, bias2, *, H, W, bt):
    n_pad_batch, hw, kp = patches.shape
    c_bb = conv_w.shape[1]
    c_neck = neck_w.shape[1]
    n_out = head_w.shape[1]
    kernel = functools.partial(_fused_ocr_kernel, H=H, W=W, bt=bt)
    return pl.pallas_call(
        kernel,
        out_shape=jax.ShapeDtypeStruct((n_pad_batch, W, n_out), jnp.float32),
        grid=(n_pad_batch // bt,),
        in_specs=[
            pl.BlockSpec((bt, hw, kp), lambda n: (n, 0, 0)),
            pl.BlockSpec((kp, c_bb), lambda n: (0, 0)),
            pl.BlockSpec((c_bb, c_neck), lambda n: (0, 0)),
            pl.BlockSpec((c_neck, n_out), lambda n: (0, 0)),
            pl.BlockSpec((2, n_out), lambda n: (0, 0)),
        ],
        out_specs=pl.BlockSpec((bt, W, n_out), lambda n: (n, 0, 0)),
        compiler_params=pltpu.CompilerParams(
            dimension_semantics=("parallel",)),   # shard batch steps across TCs (v7x)
    )(patches, conv_w, neck_w, head_w, bias2)


# ----------------------------------------------------------------------------
# Jitted wrapper: bf16 cast first, single halo pad, im2col (+ bias lane), then
# one fused pallas_call; final slice strips lane / batch padding.
# ----------------------------------------------------------------------------
def _im2col_patches(x_nchw, k_pad):
    N, C, H, W = x_nchw.shape
    x = x_nchw.astype(jnp.bfloat16)                       # cast BEFORE layout ops
    x = jnp.transpose(x, (0, 2, 3, 1))                    # NCHW -> NHWC
    xp = jnp.pad(x, ((0, 0), (1, 1), (1, 1), (0, 0)))     # 3x3 / pad=1 halo
    taps = [xp[:, dh:dh + H, dw:dw + W, :] for dh in range(3) for dw in range(3)]
    taps.append(jnp.ones((N, H, W, 1), jnp.bfloat16))     # constant-1 bias lane
    patches = jnp.concatenate(taps, axis=-1)              # (N, H, W, 9C+1)
    extra = k_pad - patches.shape[-1]
    if extra:
        patches = jnp.pad(patches, ((0, 0), (0, 0), (0, 0), (0, extra)))
    return patches.reshape(N, H * W, k_pad)


def _base_model_forward(params, x_nchw, *, num_classes):
    N, _, H, W = x_nchw.shape
    k_pad = params['conv_w'].shape[0]
    patches = _im2col_patches(x_nchw, k_pad)

    # Batch tile: big enough to amortize step overhead / fill the MXU, but keep
    # >= 2 grid steps when N >= 2 so both v7x TensorCores get work.
    bt = max(1, min(B_TILE_TARGET, (N + 1) // 2))
    pad_n = (-N) % bt
    if pad_n:
        patches = jnp.pad(patches, ((0, pad_n), (0, 0), (0, 0)))

    logits = fused_ocr_forward(
        patches, params['conv_w'], params['neck_w'], params['head_w'],
        params['bias2'], H=H, W=W, bt=bt)
    # return_all_feats == False -> head output only (no dead y-dict work).
    return logits[:N, :, :num_classes]


# ----------------------------------------------------------------------------
# Model: deterministic parameter init mirroring BaseModel._initialize_weights
# ----------------------------------------------------------------------------
class PallasBaseModel:
    def __init__(self, key, in_channels=3, backbone_channels=16,
                 neck_hidden=32, num_classes=40):
        k_conv, k_neck, k_head = jax.random.split(key, 3)

        # Conv2d: kaiming_normal_(mode='fan_out') -> std = sqrt(2/(O*kh*kw)), bias=0
        fan_out = backbone_channels * 9
        w_conv = (2.0 / fan_out) ** 0.5 * jax.random.normal(
            k_conv, (backbone_channels, in_channels, 3, 3), jnp.float32)
        conv_bias = jnp.zeros((backbone_channels,), jnp.float32)

        # BatchNorm2d (eval): weight=1, bias=0, running mean=0 / var=1
        gamma = jnp.ones((backbone_channels,), jnp.float32)
        beta = jnp.zeros((backbone_channels,), jnp.float32)
        r_mean = jnp.zeros((backbone_channels,), jnp.float32)
        r_var = jnp.ones((backbone_channels,), jnp.float32)
        eps = 1e-5
        bn_scale = gamma / jnp.sqrt(r_var + eps)
        bn_shift = beta + (conv_bias - r_mean) * bn_scale

        # Fold BN scale into the conv weights; reorder (O,I,kh,kw) -> (kh*kw*I, O);
        # append the BN-shift row (multiplied by the constant-1 bias lane in-kernel);
        # zero-pad K to a lane/sublane-friendly width.
        w_folded = w_conv * bn_scale[:, None, None, None]
        w_tap = jnp.transpose(w_folded, (2, 3, 1, 0)).reshape(
            9 * in_channels, backbone_channels)
        k_real = 9 * in_channels + 1                       # taps + bias lane
        k_pad = _round_up(max(k_real, 32), 16)
        conv_w = jnp.zeros((k_pad, backbone_channels), jnp.float32)
        conv_w = conv_w.at[:9 * in_channels, :].set(w_tap)
        conv_w = conv_w.at[9 * in_channels, :].set(bn_shift)
        conv_w = conv_w.astype(jnp.bfloat16)

        # Neck Linear: normal(0, 0.01), bias=0
        neck_w = (0.01 * jax.random.normal(
            k_neck, (backbone_channels, neck_hidden), jnp.float32)
                  ).astype(jnp.bfloat16)
        neck_b = jnp.zeros((neck_hidden,), jnp.float32)

        # Head Linear: normal(0, 0.01), bias=0; zero-pad out-channels to 128 lanes.
        n_out = _round_up(max(num_classes, LANE), LANE)
        head_w = jnp.zeros((neck_hidden, n_out), jnp.float32)
        head_w = head_w.at[:, :num_classes].set(
            0.01 * jax.random.normal(k_head, (neck_hidden, num_classes),
                                     jnp.float32))
        head_w = head_w.astype(jnp.bfloat16)
        head_b = jnp.zeros((num_classes,), jnp.float32)

        # Pack the two small biases into one lane-dense slab (fewer DMA descriptors).
        bias2 = jnp.zeros((2, n_out), jnp.float32)
        bias2 = bias2.at[0, :neck_hidden].set(neck_b)
        bias2 = bias2.at[1, :num_classes].set(head_b)

        self.num_classes = num_classes
        self.params = dict(conv_w=conv_w, neck_w=neck_w, head_w=head_w, bias2=bias2)
        self._forward = jax.jit(functools.partial(
            _base_model_forward, num_classes=num_classes))

    def __call__(self, x_nchw):
        return self._forward(self.params, x_nchw)


if __name__ == "__main__":
    key = jax.random.PRNGKey(0)
    k_param, k_data = jax.random.split(key)

    model = PallasBaseModel(k_param, in_channels=3, backbone_channels=16,
                            neck_hidden=32, num_classes=40)

    x = jax.random.normal(k_data, (2, 3, 16, 16), dtype=jnp.float32)  # NCHW
    out = model(x)
    out = jax.block_until_ready(out)

    assert out.shape == (2, 16, 40), out.shape
    assert bool(jnp.all(jnp.isfinite(out)))
    print("KERNEL_OK")
</pallas_src>

<mosaic_0001>
module attributes {stable_mosaic.version = 11 : i64} {
  func.func @_fused_ocr_kernel(%arg0: i32, %arg1: memref<1x256x32xbf16, #tpu.memory_space<vmem>>, %arg2: memref<32x16xbf16, #tpu.memory_space<vmem>>, %arg3: memref<16x32xbf16, #tpu.memory_space<vmem>>, %arg4: memref<32x128xbf16, #tpu.memory_space<vmem>>, %arg5: memref<2x128xf32, #tpu.memory_space<vmem>>, %arg6: memref<1x16x128xf32, #tpu.memory_space<vmem>>) attributes {dimension_semantics = [#tpu.dimension_semantics<parallel>], iteration_bounds = array<i64: 2>, scalar_prefetch = 0 : i64, scratch_operands = 0 : i64, tpu.core_type = #tpu.core_type<tc>, window_params = [{transform_indices = @transform_0, window_bounds = array<i64: 1, 256, 32>}, {pipeline_mode = #tpu.pipeline_mode<synchronous>, transform_indices = @transform_1, window_bounds = array<i64: 32, 16>}, {pipeline_mode = #tpu.pipeline_mode<synchronous>, transform_indices = @transform_2, window_bounds = array<i64: 16, 32>}, {pipeline_mode = #tpu.pipeline_mode<synchronous>, transform_indices = @transform_3, window_bounds = array<i64: 32, 128>}, {pipeline_mode = #tpu.pipeline_mode<synchronous>, transform_indices = @transform_4, window_bounds = array<i64: 2, 128>}, {transform_indices = @transform_5, window_bounds = array<i64: 1, 16, 128>}]} {
    %c0 = arith.constant 0 : index
    %c0_0 = arith.constant 0 : index
    %c0_1 = arith.constant 0 : index
    %0 = vector.load %arg1[%c0, %c0_0, %c0_1] : memref<1x256x32xbf16, #tpu.memory_space<vmem>>, vector<1x256x32xbf16>
    %1 = vector.shape_cast %0 : vector<1x256x32xbf16> to vector<256x32xbf16>
    %c0_2 = arith.constant 0 : index
    %c0_3 = arith.constant 0 : index
    %2 = vector.load %arg2[%c0_2, %c0_3] : memref<32x16xbf16, #tpu.memory_space<vmem>>, vector<32x16xbf16>
    %cst = arith.constant dense<0.000000e+00> : vector<256x16xf32>
    %3 = tpu.matmul %1, %2, %cst {dimension_numbers = #tpu.dot_dimension_numbers<[1], [0], [0], [1], [0, 0, 1, 1], [], []>} : vector<256x32xbf16>, vector<32x16xbf16>, vector<256x16xf32> -> vector<256x16xf32>
    %cst_4 = arith.constant 0.000000e+00 : f32
    %4 = vector.broadcast %cst_4 : f32 to vector<256x16xf32>
    %5 = arith.maximumf %3, %4 : vector<256x16xf32>
    %6 = vector.shape_cast %5 : vector<256x16xf32> to vector<1x16x16x16xf32>
    %cst_5 = arith.constant dense<0.000000e+00> : vector<1x16x16xf32>
    %7 = vector.multi_reduction <add>, %6, %cst_5 [1] : vector<1x16x16x16xf32> to vector<1x16x16xf32>
    %cst_6 = arith.constant 6.250000e-02 : f32
    %8 = vector.broadcast %cst_6 : f32 to vector<1x16x16xf32>
    %9 = arith.mulf %7, %8 : vector<1x16x16xf32>
    %10 = vector.shape_cast %9 : vector<1x16x16xf32> to vector<16x16xf32>
    %c0_7 = arith.constant 0 : index
    %c0_8 = arith.constant 0 : index
    %11 = vector.load %arg5[%c0_7, %c0_8] : memref<2x128xf32, #tpu.memory_space<vmem>>, vector<2x128xf32>
    %12 = arith.truncf %10 : vector<16x16xf32> to vector<16x16xbf16>
    %c0_9 = arith.constant 0 : index
    %c0_10 = arith.constant 0 : index
    %13 = vector.load %arg3[%c0_9, %c0_10] : memref<16x32xbf16, #tpu.memory_space<vmem>>, vector<16x32xbf16>
    %cst_11 = arith.constant dense<0.000000e+00> : vector<16x32xf32>
    %14 = tpu.matmul %12, %13, %cst_11 {dimension_numbers = #tpu.dot_dimension_numbers<[1], [0], [0], [1], [0, 0, 1, 1], [], []>} : vector<16x16xbf16>, vector<16x32xbf16>, vector<16x32xf32> -> vector<16x32xf32>
    %15 = vector.extract_strided_slice %11 {offsets = [0, 0], sizes = [1, 32], strides = [1, 1]} : vector<2x128xf32> to vector<1x32xf32>
    %16 = vector.broadcast %15 : vector<1x32xf32> to vector<16x32xf32>
    %17 = arith.addf %14, %16 : vector<16x32xf32>
    %cst_12 = arith.constant 0.000000e+00 : f32
    %18 = vector.broadcast %cst_12 : f32 to vector<16x32xf32>
    %19 = arith.maximumf %17, %18 : vector<16x32xf32>
    %20 = arith.truncf %19 : vector<16x32xf32> to vector<16x32xbf16>
    %c0_13 = arith.constant 0 : index
    %c0_14 = arith.constant 0 : index
    %21 = vector.load %arg4[%c0_13, %c0_14] : memref<32x128xbf16, #tpu.memory_space<vmem>>, vector<32x128xbf16>
    %cst_15 = arith.constant dense<0.000000e+00> : vector<16x128xf32>
    %22 = tpu.matmul %20, %21, %cst_15 {dimension_numbers = #tpu.dot_dimension_numbers<[1], [0], [0], [1], [0, 0, 1, 1], [], []>} : vector<16x32xbf16>, vector<32x128xbf16>, vector<16x128xf32> -> vector<16x128xf32>
    %23 = vector.extract_strided_slice %11 {offsets = [1, 0], sizes = [1, 128], strides = [1, 1]} : vector<2x128xf32> to vector<1x128xf32>
    %24 = vector.broadcast %23 : vector<1x128xf32> to vector<16x128xf32>
    %25 = arith.addf %22, %24 : vector<16x128xf32>
    %26 = vector.shape_cast %25 : vector<16x128xf32> to vector<1x16x128xf32>
    %c0_16 = arith.constant 0 : index
    %c0_17 = arith.constant 0 : index
    %c0_18 = arith.constant 0 : index
    %27 = vector.load %arg6[%c0_16, %c0_17, %c0_18] : memref<1x16x128xf32, #tpu.memory_space<vmem>>, vector<1x16x128xf32>
    tpu.vector_store %arg6[%c0_16, %c0_17, %c0_18], %26 {strides = array<i32>} : memref<1x16x128xf32, #tpu.memory_space<vmem>>, vector<1x16x128xf32>,
    return
  }
  func.func @transform_0(%arg0: i32) -> (i32, i32, i32) {
    %c0_i32 = arith.constant 0 : i32
    %c0_i32_0 = arith.constant 0 : i32
    %c0_i32_1 = arith.constant 0 : i32
    return %arg0, %c0_i32, %c0_i32_0 : i32, i32, i32
  }
  func.func @transform_1(%arg0: i32) -> (i32, i32) {
    %c0_i32 = arith.constant 0 : i32
    %c0_i32_0 = arith.constant 0 : i32
    %c0_i32_1 = arith.constant 0 : i32
    return %c0_i32, %c0_i32_0 : i32, i32
  }
  func.func @transform_2(%arg0: i32) -> (i32, i32) {
    %c0_i32 = arith.constant 0 : i32
    %c0_i32_0 = arith.constant 0 : i32
    %c0_i32_1 = arith.constant 0 : i32
    return %c0_i32, %c0_i32_0 : i32, i32
  }
  func.func @transform_3(%arg0: i32) -> (i32, i32) {
    %c0_i32 = arith.constant 0 : i32
    %c0_i32_0 = arith.constant 0 : i32
    %c0_i32_1 = arith.constant 0 : i32
    return %c0_i32, %c0_i32_0 : i32, i32
  }
  func.func @transform_4(%arg0: i32) -> (i32, i32) {
    %c0_i32 = arith.constant 0 : i32
    %c0_i32_0 = arith.constant 0 : i32
    %c0_i32_1 = arith.constant 0 : i32
    return %c0_i32, %c0_i32_0 : i32, i32
  }
  func.func @transform_5(%arg0: i32) -> (i32, i32, i32) {
    %c0_i32 = arith.constant 0 : i32
    %c0_i32_0 = arith.constant 0 : i32
    %c0_i32_1 = arith.constant 0 : i32
    return %arg0, %c0_i32, %c0_i32_0 : i32, i32, i32
  }
}

</mosaic_0001>

<llo_original>
// kernel: _base_model_forward.1
$region0: #{_base_model_forward.1}
  #allocation0 [shape = 'u32[]', space=smem, size = 0x4, offset = 0x4, fixed_abs, tag = 'smem constant byte address 0x4 - core index']
  #allocation1 [shape = 'u32[72,128]{1,0:T(1,128)}', space=vmem, size = 0x9000, scoped, tag = 'internal scratch']
  %s0 = inlined_call_operand.vmem [shape: bf16[2,256,32], index: 0, kind: input, shape index: {}]
  %s1 = inlined_call_operand.vmem [shape: bf16[32,16], index: 1, kind: input, shape index: {}]
  %s2 = inlined_call_operand.vmem [shape: bf16[16,32], index: 2, kind: input, shape index: {}]
  %s3 = inlined_call_operand.vmem [shape: bf16[32,128], index: 3, kind: input, shape index: {}]
  %s4 = inlined_call_operand.vmem [shape: f32[2,128], index: 4, kind: input, shape index: {}]
  %s5 = inlined_call_operand.hbm [shape: f32[2,16,128], index: 5, kind: output, shape index: {}]
  %s6 = sld [smem:[#allocation0]]
  $region53: #{_base_model_forward.1} parent=0
    _
  %s8 = ssub.s32 1, %s6
  %s9 = scalar_select 0, %s8, %s6
  $region1: #{_base_model_forward.1} parent=0
    #allocation2 [shape = 'u8[16384]{0}', space=vmem, size = 0x4000, scoped, tag = 'output window, operand 0']
    #allocation3 [shape = 's32[2]{0}', space=sflag, size = 0x8, scoped, tag = 'scoped memory for _base_model_forward.1']
    %10 = vsyncpa [#allocation3], 0
    %s11 = scalar_lea.sflag [#allocation3], 1
    %12 = vsyncpa %s11, 0
    loop: start=0, step=1, limit=4
    $region2: #{_base_model_forward.1} parent=1 // loop_pre_header
      _
    $region3: #{_base_model_forward.1} parent=1 // loop_header
      %s14 = sphi 0, %s18
      %p15 = scmp.ge.s32.totalorder %s14, 4
      %s24 = sphi 0, %s26
      %s27 = sphi 0, %s24
      %s28 = sphi 0, %s27
      %s44 = sphi 0, %s28
      %s48 = sphi 0, %s48
      %s50 = sphi 0, %s48
      %s51 = sphi 0, %s50
      %s65 = sphi 0, %s51
      %s69 = sphi 0, %s69
      %s71 = sphi 0, %s69
      %s72 = sphi 0, %s71
      %s86 = sphi 0, %s72
      %s90 = sphi 0, %s90
      %s92 = sphi 0, %s90
      %s93 = sphi 0, %s92
      %s107 = sphi 0, %s93
      %s111 = sphi 0, %s111
      %s113 = sphi 0, %s111
      %s114 = sphi 0, %s113
      %s128 = sphi 0, %s114
      %s134 = sphi 0, %s136
      %s137 = sphi 0, %s134
      %s138 = sphi 0, %s137
      %s154 = sphi 0, %s138
    $region4: #{_base_model_forward.1} parent=1 // loop_header_branch
      %17 = sbr.rel (%p15) target = $region8
    $region5: #{_base_model_forward.1} parent=1 // loop_body
      %s19 = ssub.s32 %s14, 1
      %s20 = ssub.s32 %s14, 2
      %s21 = sadd.s32 %s14, 1
      %s22 = ssub.s32 %s14, %s21
      %p23 = scmp.eq.s32.totalorder %s22, 0
      %s25 = sadd.s32 %s24, 1
      %s26 = scalar_select %p23, %s24, %s25
      %p29 = pneg %p23
      %p30 = scmp.eq.s32.totalorder %s14, 1
      %p31 = por %p29, %p30
      %p32 = scmp.ne.s32.totalorder %s24, %s27
      %p33 = scmp.eq.s32.totalorder %s14, 0
      %p34 = por %p32, %p33
      %p35 = scmp.ne.s32.totalorder %s24, %s27
      %p36 = scmp.eq.s32.totalorder %s19, 1
      %p37 = por %p35, %p36
      %p38 = scmp.ne.s32.totalorder %s27, %s28
      %p39 = scmp.eq.s32.totalorder %s19, 0
      %p40 = por %p38, %p39
      %p41 = scmp.ne.s32.totalorder %s27, %s28
      %p42 = scmp.eq.s32.totalorder %s20, 1
      %p43 = por %p41, %p42
      %p45 = scmp.ne.s32.totalorder %s28, %s44
      %p46 = scmp.eq.s32.totalorder %s20, 0
      %p47 = por %p45, %p46
      %s49 = sadd.s32 %s48, 1
      %p52 = scmp.eq.s32.totalorder %s14, 1
      %p53 = scmp.ne.s32.totalorder %s48, %s50
      %p54 = scmp.eq.s32.totalorder %s14, 0
      %p55 = por %p53, %p54
      %p56 = scmp.ne.s32.totalorder %s48, %s50
      %p57 = scmp.eq.s32.totalorder %s19, 1
      %p58 = por %p56, %p57
      %p59 = scmp.ne.s32.totalorder %s50, %s51
      %p60 = scmp.eq.s32.totalorder %s19, 0
      %p61 = por %p59, %p60
      %p62 = scmp.ne.s32.totalorder %s50, %s51
      %p63 = scmp.eq.s32.totalorder %s20, 1
      %p64 = por %p62, %p63
      %p66 = scmp.ne.s32.totalorder %s51, %s65
      %p67 = scmp.eq.s32.totalorder %s20, 0
      %p68 = por %p66, %p67
      %s70 = sadd.s32 %s69, 1
      %p73 = scmp.eq.s32.totalorder %s14, 1
      %p74 = scmp.ne.s32.totalorder %s69, %s71
      %p75 = scmp.eq.s32.totalorder %s14, 0
      %p76 = por %p74, %p75
      %p77 = scmp.ne.s32.totalorder %s69, %s71
      %p78 = scmp.eq.s32.totalorder %s19, 1
      %p79 = por %p77, %p78
      %p80 = scmp.ne.s32.totalorder %s71, %s72
      %p81 = scmp.eq.s32.totalorder %s19, 0
      %p82 = por %p80, %p81
      %p83 = scmp.ne.s32.totalorder %s71, %s72
      %p84 = scmp.eq.s32.totalorder %s20, 1
      %p85 = por %p83, %p84
      %p87 = scmp.ne.s32.totalorder %s72, %s86
      %p88 = scmp.eq.s32.totalorder %s20, 0
      %p89 = por %p87, %p88
      %s91 = sadd.s32 %s90, 1
      %p94 = scmp.eq.s32.totalorder %s14, 1
      %p95 = scmp.ne.s32.totalorder %s90, %s92
      %p96 = scmp.eq.s32.totalorder %s14, 0
      %p97 = por %p95, %p96
      %p98 = scmp.ne.s32.totalorder %s90, %s92
      %p99 = scmp.eq.s32.totalorder %s19, 1
      %p100 = por %p98, %p99
      %p101 = scmp.ne.s32.totalorder %s92, %s93
      %p102 = scmp.eq.s32.totalorder %s19, 0
      %p103 = por %p101, %p102
      %p104 = scmp.ne.s32.totalorder %s92, %s93
      %p105 = scmp.eq.s32.totalorder %s20, 1
      %p106 = por %p104, %p105
      %p108 = scmp.ne.s32.totalorder %s93, %s107
      %p109 = scmp.eq.s32.totalorder %s20, 0
      %p110 = por %p108, %p109
      %s112 = sadd.s32 %s111, 1
      %p115 = scmp.eq.s32.totalorder %s14, 1
      %p116 = scmp.ne.s32.totalorder %s111, %s113
      %p117 = scmp.eq.s32.totalorder %s14, 0
      %p118 = por %p116, %p117
      %p119 = scmp.ne.s32.totalorder %s111, %s113
      %p120 = scmp.eq.s32.totalorder %s19, 1
      %p121 = por %p119, %p120
      %p122 = scmp.ne.s32.totalorder %s113, %s114
      %p123 = scmp.eq.s32.totalorder %s19, 0
      %p124 = por %p122, %p123
      %p125 = scmp.ne.s32.totalorder %s113, %s114
      %p126 = scmp.eq.s32.totalorder %s20, 1
      %p127 = por %p125, %p126
      %p129 = scmp.ne.s32.totalorder %s114, %s128
      %p130 = scmp.eq.s32.totalorder %s20, 0
      %p131 = por %p129, %p130
      %s132 = ssub.s32 %s14, %s21
      %p133 = scmp.eq.s32.totalorder %s132, 0
      %s135 = sadd.s32 %s134, 1
      %s136 = scalar_select %p133, %s134, %s135
      %p139 = pneg %p133
      %p140 = scmp.eq.s32.totalorder %s14, 1
      %p141 = por %p139, %p140
      %p142 = scmp.ne.s32.totalorder %s134, %s137
      %p143 = scmp.eq.s32.totalorder %s14, 0
      %p144 = por %p142, %p143
      %p145 = scmp.ne.s32.totalorder %s134, %s137
      %p146 = scmp.eq.s32.totalorder %s19, 1
      %p147 = por %p145, %p146
      %p148 = scmp.ne.s32.totalorder %s137, %s138
      %p149 = scmp.eq.s32.totalorder %s19, 0
      %p150 = por %p148, %p149
      %p151 = scmp.ne.s32.totalorder %s137, %s138
      %p152 = scmp.eq.s32.totalorder %s20, 1
      %p153 = por %p151, %p152
      %p155 = scmp.ne.s32.totalorder %s138, %s154
      %p156 = scmp.eq.s32.totalorder %s20, 0
      %p157 = por %p155, %p156
      %p158 = scmp.le.s32.totalorder 1, %s14
      %p159 = scmp.lt.s32.totalorder %s14, 3
      %p160 = pnand %p158, %p159
      %p161 = pneg %p160
      // Predicated region
      $region9: #{_base_model_forward.1} parent=5 // pred_check
        _
      $region10: #{_base_model_forward.1} parent=5 // pred_check_branch
        %163 = sbr.rel (%p160) target = $region12
      $region11: #{_base_model_forward.1} parent=5 // pred_region
        %s164 = ssub.s32 %s14, 1
        // Predicated region
        $region13: #{_base_model_forward.1} parent=11 // pred_check
          %p165 = pneg %p61
        $region14: #{_base_model_forward.1} parent=11 // pred_check_branch
          %167 = sbr.rel (%p165) target = $region16
        $region15: #{_base_model_forward.1} parent=11 // pred_region
          _
        $region16: #{_base_model_forward.1} parent=11 // pred_fallthru
          _
        // Predicated region
        $region17: #{_base_model_forward.1} parent=11 // pred_check
          %p168 = pneg %p82
        $region18: #{_base_model_forward.1} parent=11 // pred_check_branch
          %170 = sbr.rel (%p168) target = $region20
        $region19: #{_base_model_forward.1} parent=11 // pred_region
          _
        $region20: #{_base_model_forward.1} parent=11 // pred_fallthru
          _
        // Predicated region
        $region21: #{_base_model_forward.1} parent=11 // pred_check
          %p171 = pneg %p103
        $region22: #{_base_model_forward.1} parent=11 // pred_check_branch
          %173 = sbr.rel (%p171) target = $region24
        $region23: #{_base_model_forward.1} parent=11 // pred_region
          _
        $region24: #{_base_model_forward.1} parent=11 // pred_fallthru
          _
        // Predicated region
        $region25: #{_base_model_forward.1} parent=11 // pred_check
          %p174 = pneg %p124
        $region26: #{_base_model_forward.1} parent=11 // pred_check_branch
          %176 = sbr.rel (%p174) target = $region28
        $region27: #{_base_model_forward.1} parent=11 // pred_region
          _
        $region28: #{_base_model_forward.1} parent=11 // pred_fallthru
          _
      $region12: #{_base_model_forward.1} parent=5 // pred_fallthru
        _
      %p177 = scmp.lt.s32.totalorder %s14, 2
      // Predicated region
      $region29: #{_base_model_forward.1} parent=5 // pred_check
        %p178 = pneg %p177
      $region30: #{_base_model_forward.1} parent=5 // pred_check_branch
        %180 = sbr.rel (%p178) target = $region32
      $region31: #{_base_model_forward.1} parent=5 // pred_region
        // Predicated region
        $region33: #{_base_model_forward.1} parent=31 // pred_check
          %p181 = pneg %p34
        $region34: #{_base_model_forward.1} parent=31 // pred_check_branch
          %183 = sbr.rel (%p181) target = $region36
        $region35: #{_base_model_forward.1} parent=31 // pred_region
          %p184 = scmp.lt.s32.totalorder %s14, 1
          %s185 = scalar_select %p184, %s14, 1
          %s186 = smul.addr %s185, 32
          %s187 = smul.addr %s186, 4
          %s188 = scalar_lea.vmem %s0, %s187
        $region36: #{_base_model_forward.1} parent=31 // pred_fallthru
          _
      $region32: #{_base_model_forward.1} parent=5 // pred_fallthru
        _
      %p189 = scmp.le.s32.totalorder 1, %s14
      %p190 = scmp.lt.s32.totalorder %s14, 3
      %p191 = pnand %p189, %p190
      %p192 = pneg %p191
      // Predicated region
      $region37: #{_base_model_forward.1} parent=5 // pred_check
        _
      $region38: #{_base_model_forward.1} parent=5 // pred_check_branch
        %194 = sbr.rel (%p191) target = $region40
      $region39: #{_base_model_forward.1} parent=5 // pred_region
        %s195 = ssub.s32 %s14, 1
        %p196 = scmp.lt.s32.totalorder %s19, 1
        %s197 = scalar_select %p196, %s19, 1
        %s198 = smul.addr %s197, 32
        %s199 = smul.addr %s198, 4
        %s200 = scalar_lea.vmem %s0, %s199
        %p201 = pneg %p40
        %p202 = pneg %p37
        %p203 = pneg %p61
        %p204 = pneg %p58
        %p205 = pneg %p82
        %p206 = pneg %p79
        %p207 = pneg %p103
        %p208 = pneg %p100
        %p209 = pneg %p124
        %p210 = pneg %p121
        %p211 = pneg %p150
        %p212 = pneg %p147
        %s213 = sand.u32 %s137, 1
        %s214 = scalar_lea.sflag [#allocation3], %s213
        %s215 = sand.u32 %s137, 1
        %s216 = smul.addr %s215, 16
        %s217 = scalar_lea.vmem [#allocation2], %s216
        %p218 = scmp.lt.s32.totalorder %s19, 1
        %s219 = scalar_select %p218, %s19, 1
        %s220 = smul.addr %s219, 32
        %s221 = smul.addr %s220, 4
        %s222 = scalar_lea.vmem %s0, %s221
        %v224 = vld [vmem:[%s222] sm:$0xf]
        %v225 = vld [vmem:[%s222 + $0x4] sm:$0xf]
        %v226 = vld [vmem:[%s222 + $0x8] sm:$0xf]
        %v227 = vld [vmem:[%s222 + $0xc] sm:$0xf]
        %v228 = vld [vmem:[%s222 + $0x10] sm:$0xf]
        %v229 = vld [vmem:[%s222 + $0x14] sm:$0xf]
        %v230 = vld [vmem:[%s222 + $0x18] sm:$0xf]
        %v231 = vld [vmem:[%s222 + $0x1c] sm:$0xf]
        %v232 = vld [vmem:[%s222 + $0x20] sm:$0xf]
        %v233 = vld [vmem:[%s222 + $0x24] sm:$0xf]
        %v234 = vld [vmem:[%s222 + $0x28] sm:$0xf]
        %v235 = vld [vmem:[%s222 + $0x2c] sm:$0xf]
        %v236 = vld [vmem:[%s222 + $0x30] sm:$0xf]
        %v237 = vld [vmem:[%s222 + $0x34] sm:$0xf]
        %v238 = vld [vmem:[%s222 + $0x38] sm:$0xf]
        %v239 = vld [vmem:[%s222 + $0x3c] sm:$0xf]
        %v240 = vld [vmem:[%s222 + $0x40] sm:$0xf]
        %v241 = vld [vmem:[%s222 + $0x44] sm:$0xf]
        %v242 = vld [vmem:[%s222 + $0x48] sm:$0xf]
        %v243 = vld [vmem:[%s222 + $0x4c] sm:$0xf]
        %v244 = vld [vmem:[%s222 + $0x50] sm:$0xf]
        %v245 = vld [vmem:[%s222 + $0x54] sm:$0xf]
        %v246 = vld [vmem:[%s222 + $0x58] sm:$0xf]
        %v247 = vld [vmem:[%s222 + $0x5c] sm:$0xf]
        %v248 = vld [vmem:[%s222 + $0x60] sm:$0xf]
        %v249 = vld [vmem:[%s222 + $0x64] sm:$0xf]
        %v250 = vld [vmem:[%s222 + $0x68] sm:$0xf]
        %v251 = vld [vmem:[%s222 + $0x6c] sm:$0xf]
        %v252 = vld [vmem:[%s222 + $0x70] sm:$0xf]
        %v253 = vld [vmem:[%s222 + $0x74] sm:$0xf]
        %v254 = vld [vmem:[%s222 + $0x78] sm:$0xf]
        %v255 = vld [vmem:[%s222 + $0x7c] sm:$0xf]
        %v256 = vld [vmem:[%s1] sm:$0xf]
        %v257 = vld [vmem:[%s1 + $0x4] sm:$0xf]
        %v258 = vld [vmem:[%s1 + $0x8] sm:$0xf]
        %v259 = vld [vmem:[%s1 + $0xc] sm:$0xf]
        %v292 = vunpack.c.l.b16 %v224
        %v293 = vunpack.c.l.b16 %v225
        %v294 = vunpack.c.l.b16 %v226
        %v295 = vunpack.c.l.b16 %v227
        %v296 = vunpack.c.l.b16 %v228
        %v297 = vunpack.c.l.b16 %v229
        %v298 = vunpack.c.l.b16 %v230
        %v299 = vunpack.c.l.b16 %v231
        %v300 = vunpack.c.l.b16 %v232
        %v301 = vunpack.c.l.b16 %v233
        %v302 = vunpack.c.l.b16 %v234
        %v303 = vunpack.c.l.b16 %v235
        %v304 = vunpack.c.l.b16 %v236
        %v305 = vunpack.c.l.b16 %v237
        %v306 = vunpack.c.l.b16 %v238
        %v307 = vunpack.c.l.b16 %v239
        %v308 = vunpack.c.l.b16 %v240
        %v309 = vunpack.c.l.b16 %v241
        %v310 = vunpack.c.l.b16 %v242
        %v311 = vunpack.c.l.b16 %v243
        %v312 = vunpack.c.l.b16 %v244
        %v313 = vunpack.c.l.b16 %v245
        %v314 = vunpack.c.l.b16 %v246
        %v315 = vunpack.c.l.b16 %v247
        %v316 = vunpack.c.l.b16 %v248
        %v317 = vunpack.c.l.b16 %v249
        %v318 = vunpack.c.l.b16 %v250
        %v319 = vunpack.c.l.b16 %v251
        %v320 = vunpack.c.l.b16 %v252
        %v321 = vunpack.c.l.b16 %v253
        %v322 = vunpack.c.l.b16 %v254
        %v323 = vunpack.c.l.b16 %v255
        %v324 = vpack.c.b16 %v293, %v292
        %v325 = vpack.c.b16 %v295, %v294
        %v326 = vpack.c.b16 %v297, %v296
        %v327 = vpack.c.b16 %v299, %v298
        %v328 = vpack.c.b16 %v301, %v300
        %v329 = vpack.c.b16 %v303, %v302
        %v330 = vpack.c.b16 %v305, %v304
        %v331 = vpack.c.b16 %v307, %v306
        %v332 = vpack.c.b16 %v309, %v308
        %v333 = vpack.c.b16 %v311, %v310
        %v334 = vpack.c.b16 %v313, %v312
        %v335 = vpack.c.b16 %v315, %v314
        %v336 = vpack.c.b16 %v317, %v316
        %v337 = vpack.c.b16 %v319, %v318
        %v338 = vpack.c.b16 %v321, %v320
        %v339 = vpack.c.b16 %v323, %v322
        %v344 = vunpack.c.l.b16 %v256
        %v345 = vunpack.c.l.b16 %v257
        %v346 = vunpack.c.l.b16 %v258
        %v347 = vunpack.c.l.b16 %v259
        %v348 = vpack.c.b16 %v345, %v344
        %v349 = vpack.c.b16 %v347, %v346
        %vm352 = vcmask 261120
        %v354 = vsel %vm352, %v324, 0
        %v357 = vsel %vm352, %v325, 0
        %v360 = vsel %vm352, %v326, 0
        %v363 = vsel %vm352, %v327, 0
        %v366 = vsel %vm352, %v328, 0
        %v369 = vsel %vm352, %v329, 0
        %v372 = vsel %vm352, %v330, 0
        %v375 = vsel %vm352, %v331, 0
        %v378 = vsel %vm352, %v332, 0
        %v381 = vsel %vm352, %v333, 0
        %v384 = vsel %vm352, %v334, 0
        %v387 = vsel %vm352, %v335, 0
        %v390 = vsel %vm352, %v336, 0
        %v393 = vsel %vm352, %v337, 0
        %v396 = vsel %vm352, %v338, 0
        %v399 = vsel %vm352, %v339, 0
        %401 = vmatpush.bf16.msra.mxu0 0
        %402 = vmatpush.bf16.msra.mxu0 0
        %403 = vmatpush.bf16.msra.mxu0 0
        %404 = vmatpush.bf16.msra.mxu0 0
        %405 = vmatpush.bf16.msra.mxu0 0
        %406 = vmatpush.bf16.msra.mxu0 0
        %407 = vmatpush.bf16.msra.mxu0 %v349
        %408 = vmatpush.bf16.msra.mxu0 %v348
        %409 = vmatmul.bf16.gmra.mxu0 %v354
        %v410 = vpop.f32.mrf.mxu0
        %v411 = vadd.f32 0.0, %v410
        %v412 = vpop.f32.mrf.mxu0
        %v413 = vadd.f32 0.0, %v412
        %414 = vmatmul.bf16.gmra.mxu0 %v357
        %v415 = vpop.f32.mrf.mxu0
        %v416 = vadd.f32 0.0, %v415
        %v417 = vpop.f32.mrf.mxu0
        %v418 = vadd.f32 0.0, %v417
        %419 = vmatmul.bf16.gmra.mxu0 %v360
        %v420 = vpop.f32.mrf.mxu0
        %v421 = vadd.f32 0.0, %v420
        %v422 = vpop.f32.mrf.mxu0
        %v423 = vadd.f32 0.0, %v422
        %424 = vmatmul.bf16.gmra.mxu0 %v363
        %v425 = vpop.f32.mrf.mxu0
        %v426 = vadd.f32 0.0, %v425
        %v427 = vpop.f32.mrf.mxu0
        %v428 = vadd.f32 0.0, %v427
        %429 = vmatmul.bf16.gmra.mxu0 %v366
        %v430 = vpop.f32.mrf.mxu0
        %v431 = vadd.f32 0.0, %v430
        %v432 = vpop.f32.mrf.mxu0
        %v433 = vadd.f32 0.0, %v432
        %434 = vmatmul.bf16.gmra.mxu0 %v369
        %v435 = vpop.f32.mrf.mxu0
        %v436 = vadd.f32 0.0, %v435
        %v437 = vpop.f32.mrf.mxu0
        %v438 = vadd.f32 0.0, %v437
        %439 = vmatmul.bf16.gmra.mxu0 %v372
        %v440 = vpop.f32.mrf.mxu0
        %v441 = vadd.f32 0.0, %v440
        %v442 = vpop.f32.mrf.mxu0
        %v443 = vadd.f32 0.0, %v442
        %444 = vmatmul.bf16.gmra.mxu0 %v375
        %v445 = vpop.f32.mrf.mxu0
        %v446 = vadd.f32 0.0, %v445
        %v447 = vpop.f32.mrf.mxu0
        %v448 = vadd.f32 0.0, %v447
        %449 = vmatmul.bf16.gmra.mxu0 %v378
        %v450 = vpop.f32.mrf.mxu0
        %v451 = vadd.f32 0.0, %v450
        %v452 = vpop.f32.mrf.mxu0
        %v453 = vadd.f32 0.0, %v452
        %454 = vmatmul.bf16.gmra.mxu0 %v381
        %v455 = vpop.f32.mrf.mxu0
        %v456 = vadd.f32 0.0, %v455
        %v457 = vpop.f32.mrf.mxu0
        %v458 = vadd.f32 0.0, %v457
        %459 = vmatmul.bf16.gmra.mxu0 %v384
        %v460 = vpop.f32.mrf.mxu0
        %v461 = vadd.f32 0.0, %v460
        %v462 = vpop.f32.mrf.mxu0
        %v463 = vadd.f32 0.0, %v462
        %464 = vmatmul.bf16.gmra.mxu0 %v387
        %v465 = vpop.f32.mrf.mxu0
        %v466 = vadd.f32 0.0, %v465
        %v467 = vpop.f32.mrf.mxu0
        %v468 = vadd.f32 0.0, %v467
        %469 = vmatmul.bf16.gmra.mxu0 %v390
        %v470 = vpop.f32.mrf.mxu0
        %v471 = vadd.f32 0.0, %v470
        %v472 = vpop.f32.mrf.mxu0
        %v473 = vadd.f32 0.0, %v472
        %474 = vmatmul.bf16.gmra.mxu0 %v393
        %v475 = vpop.f32.mrf.mxu0
        %v476 = vadd.f32 0.0, %v475
        %v477 = vpop.f32.mrf.mxu0
        %v478 = vadd.f32 0.0, %v477
        %479 = vmatmul.bf16.gmra.mxu0 %v396
        %v480 = vpop.f32.mrf.mxu0
        %v481 = vadd.f32 0.0, %v480
        %v482 = vpop.f32.mrf.mxu0
        %v483 = vadd.f32 0.0, %v482
        %484 = vmatmul.bf16.gmra.mxu0 %v399
        %v485 = vpop.f32.mrf.mxu0
        %v486 = vadd.f32 0.0, %v485
        %v487 = vpop.f32.mrf.mxu0
        %v488 = vadd.f32 0.0, %v487
        %489 = vdwg.mxu0
        %v490 = vmax.f32 %v411, 0.0
        %v491 = vmax.f32 %v413, 0.0
        %v492 = vmax.f32 %v416, 0.0
        %v493 = vmax.f32 %v418, 0.0
        %v494 = vmax.f32 %v421, 0.0
        %v495 = vmax.f32 %v423, 0.0
        %v496 = vmax.f32 %v426, 0.0
        %v497 = vmax.f32 %v428, 0.0
        %v498 = vmax.f32 %v431, 0.0
        %v499 = vmax.f32 %v433, 0.0
        %v500 = vmax.f32 %v436, 0.0
        %v501 = vmax.f32 %v438, 0.0
        %v502 = vmax.f32 %v441, 0.0
        %v503 = vmax.f32 %v443, 0.0
        %v504 = vmax.f32 %v446, 0.0
        %v505 = vmax.f32 %v448, 0.0
        %v506 = vmax.f32 %v451, 0.0
        %v507 = vmax.f32 %v453, 0.0
        %v508 = vmax.f32 %v456, 0.0
        %v509 = vmax.f32 %v458, 0.0
        %v510 = vmax.f32 %v461, 0.0
        %v511 = vmax.f32 %v463, 0.0
        %v512 = vmax.f32 %v466, 0.0
        %v513 = vmax.f32 %v468, 0.0
        %v514 = vmax.f32 %v471, 0.0
        %v515 = vmax.f32 %v473, 0.0
        %v516 = vmax.f32 %v476, 0.0
        %v517 = vmax.f32 %v478, 0.0
        %v518 = vmax.f32 %v481, 0.0
        %v519 = vmax.f32 %v483, 0.0
        %v520 = vmax.f32 %v486, 0.0
        %v521 = vmax.f32 %v488, 0.0
        %vm522 = vcmask 130048
        %v523 = vsel %vm522, %v490, 0.0
        %v524 = vsel %vm522, %v492, 0.0
        %v525 = vadd.f32 %v523, %v524
        %v526 = vsel %vm522, %v494, 0.0
        %v527 = vadd.f32 %v525, %v526
        %v528 = vsel %vm522, %v496, 0.0
        %v529 = vadd.f32 %v527, %v528
        %v530 = vsel %vm522, %v498, 0.0
        %v531 = vadd.f32 %v529, %v530
        %v532 = vsel %vm522, %v500, 0.0
        %v533 = vadd.f32 %v531, %v532
        %v534 = vsel %vm522, %v502, 0.0
        %v535 = vadd.f32 %v533, %v534
        %v536 = vsel %vm522, %v504, 0.0
        %v537 = vadd.f32 %v535, %v536
        %v538 = vsel %vm522, %v506, 0.0
        %v539 = vadd.f32 %v537, %v538
        %v540 = vsel %vm522, %v508, 0.0
        %v541 = vadd.f32 %v539, %v540
        %v542 = vsel %vm522, %v510, 0.0
        %v543 = vadd.f32 %v541, %v542
        %v544 = vsel %vm522, %v512, 0.0
        %v545 = vadd.f32 %v543, %v544
        %v546 = vsel %vm522, %v514, 0.0
        %v547 = vadd.f32 %v545, %v546
        %v548 = vsel %vm522, %v516, 0.0
        %v549 = vadd.f32 %v547, %v548
        %v550 = vsel %vm522, %v518, 0.0
        %v551 = vadd.f32 %v549, %v550
        %v552 = vsel %vm522, %v520, 0.0
        %v553 = vadd.f32 %v551, %v552
        %v554 = vsel %vm522, %v491, 0.0
        %v555 = vsel %vm522, %v493, 0.0
        %v556 = vadd.f32 %v554, %v555
        %v557 = vsel %vm522, %v495, 0.0
        %v558 = vadd.f32 %v556, %v557
        %v559 = vsel %vm522, %v497, 0.0
        %v560 = vadd.f32 %v558, %v559
        %v561 = vsel %vm522, %v499, 0.0
        %v562 = vadd.f32 %v560, %v561
        %v563 = vsel %vm522, %v501, 0.0
        %v564 = vadd.f32 %v562, %v563
        %v565 = vsel %vm522, %v503, 0.0
        %v566 = vadd.f32 %v564, %v565
        %v567 = vsel %vm522, %v505, 0.0
        %v568 = vadd.f32 %v566, %v567
        %v569 = vsel %vm522, %v507, 0.0
        %v570 = vadd.f32 %v568, %v569
        %v571 = vsel %vm522, %v509, 0.0
        %v572 = vadd.f32 %v570, %v571
        %v573 = vsel %vm522, %v511, 0.0
        %v574 = vadd.f32 %v572, %v573
        %v575 = vsel %vm522, %v513, 0.0
        %v576 = vadd.f32 %v574, %v575
        %v577 = vsel %vm522, %v515, 0.0
        %v578 = vadd.f32 %v576, %v577
        %v579 = vsel %vm522, %v517, 0.0
        %v580 = vadd.f32 %v578, %v579
        %v581 = vsel %vm522, %v519, 0.0
        %v582 = vadd.f32 %v580, %v581
        %v583 = vsel %vm522, %v521, 0.0
        %v584 = vadd.f32 %v582, %v583
        %v585 = vmul.f32 %v553, 0.0625
        %v586 = vmul.f32 %v584, 0.0625
        %v587 = vld [vmem:[%s4] sm:$0x3]
        %v588 = vpack.c.bf16 %v586, %v585
        %v589 = vld [vmem:[%s2] sm:$0xf]
        %v590 = vld [vmem:[%s2 + $0x4] sm:$0xf]
        %v591 = vperm.slane %v587, 0
        %v594 = vunpack.c.l.b16 %v589
        %v595 = vunpack.c.l.b16 %v590
        %v596 = vpack.c.b16 %v595, %v594
        %v599 = vsel %vm522, %v588, 0
        %601 = vmatpush.bf16.msra.mxu0 0
        %602 = vmatpush.bf16.msra.mxu0 0
        %603 = vmatpush.bf16.msra.mxu0 0
        %604 = vmatpush.bf16.msra.mxu0 0
        %605 = vmatpush.bf16.msra.mxu0 0
        %606 = vmatpush.bf16.msra.mxu0 0
        %607 = vmatpush.bf16.msra.mxu0 0
        %608 = vmatpush.bf16.msra.mxu0 %v596
        %609 = vmatmul.bf16.gmra.mxu0 %v599
        %v610 = vpop.f32.mrf.mxu0
        %v611 = vadd.f32 %v591, %v610
        %v612 = vpop.f32.mrf.mxu0
        %v613 = vadd.f32 %v591, %v612
        %614 = vdwg.mxu0
        %v615 = vmax.f32 %v611, 0.0
        %v616 = vmax.f32 %v613, 0.0
        %v617 = vpack.c.bf16 %v616, %v615
        %v618 = vld [vmem:[%s3] sm:$0xf]
        %v619 = vld [vmem:[%s3 + $0x4] sm:$0xf]
        %v620 = vld [vmem:[%s3 + $0x8] sm:$0xf]
        %v621 = vld [vmem:[%s3 + $0xc] sm:$0xf]
        %v622 = vperm.slane %v587, 1
        %v627 = vunpack.c.l.b16 %v618
        %v628 = vunpack.c.l.b16 %v619
        %v629 = vunpack.c.l.b16 %v620
        %v630 = vunpack.c.l.b16 %v621
        %v631 = vpack.c.b16 %v628, %v627
        %v632 = vpack.c.b16 %v630, %v629
        %v636 = vsel %vm352, %v617, 0
        %638 = vmatpush.bf16.msra.mxu0 0
        %639 = vmatpush.bf16.msra.mxu0 0
        %640 = vmatpush.bf16.msra.mxu0 0
        %641 = vmatpush.bf16.msra.mxu0 0
        %642 = vmatpush.bf16.msra.mxu0 0
        %643 = vmatpush.bf16.msra.mxu0 0
        %644 = vmatpush.bf16.msra.mxu0 %v632
        %645 = vmatpush.bf16.msra.mxu0 %v631
        %646 = vmatmul.bf16.gmra.mxu0 %v636
        %v647 = vpop.f32.mrf.mxu0
        %v648 = vadd.f32 %v622, %v647
        %v649 = vpop.f32.mrf.mxu0
        %v650 = vadd.f32 %v622, %v649
        %651 = vdwg.mxu0
        %652 = vst [vmem:[%s217] sm:$0xff] %v648
        %653 = vst [vmem:[%s217 + $0x8] sm:$0xff] %v650
        %s654 = sand.u32 %s137, 1
        %s655 = scalar_lea.sflag [#allocation3], %s654
        %s656 = sand.u32 %s137, 1
        %s657 = smul.addr %s656, 16
        %s658 = scalar_lea.vmem [#allocation2], %s657
        // Predicated region
        $region41: #{_base_model_forward.1} parent=39 // pred_check
          %p659 = pneg %p147
        $region42: #{_base_model_forward.1} parent=39 // pred_check_branch
          %661 = sbr.rel (%p659) target = $region44
        $region43: #{_base_model_forward.1} parent=39 // pred_region
          %663 = vsyncadd %s655, 0
          %s664 = smul.addr %s19, 2
          %s665 = smul.addr %s664, 8
          %s666 = scalar_lea.hbm %s5, %s665
          %s667 = sshll.u32 %s658, 4
          %s668 = int_to_ptr.vmem [resolvable:$true] %s667
          %s669 = sshll.u32 %s666, 4
          %s670 = int_to_ptr.hbm [resolvable:$true] %s669
          %675 = dma.vmem_to_hbm [thread:$0]  %s668, 256, %s670, %s655, 128, 128, 8
        $region44: #{_base_model_forward.1} parent=39 // pred_fallthru
          _
      $region40: #{_base_model_forward.1} parent=5 // pred_fallthru
        _
      %p676 = scmp.le.s32.totalorder 2, %s14
      // Predicated region
      $region45: #{_base_model_forward.1} parent=5 // pred_check
        %p677 = pneg %p676
      $region46: #{_base_model_forward.1} parent=5 // pred_check_branch
        %679 = sbr.rel (%p677) target = $region48
      $region47: #{_base_model_forward.1} parent=5 // pred_region
        %s680 = ssub.s32 %s14, 2
        // Predicated region
        $region49: #{_base_model_forward.1} parent=47 // pred_check
          %p681 = pneg %p153
        $region50: #{_base_model_forward.1} parent=47 // pred_check_branch
          %683 = sbr.rel (%p681) target = $region52
        $region51: #{_base_model_forward.1} parent=47 // pred_region
          %s684 = sand.u32 %s138, 1
          %s685 = scalar_lea.sflag [#allocation3], %s684
          %s686 = sand.u32 %s138, 1
          %s687 = smul.addr %s686, 16
          %s688 = scalar_lea.vmem [#allocation2], %s687
          %690 = dma.done %s685, 256
        $region52: #{_base_model_forward.1} parent=47 // pred_fallthru
          _
      $region48: #{_base_model_forward.1} parent=5 // pred_fallthru
        _
    $region6: #{_base_model_forward.1} parent=1 // loop_footer
      %s18 = sadd.s32 1, %s14
    $region7: #{_base_model_forward.1} parent=1 // loop_footer_branch
      %13 = sbr.rel target = $region3
    $region8: #{_base_model_forward.1} parent=1 // loop_exit
      _
    %691 = vsyncpa [#allocation3], 1
    %s692 = scalar_lea.sflag [#allocation3], 1
    %693 = vsyncpa %s692, 1

</llo_original>
